<compile_context>
chip_gen: v5e
topology: v5e:2x2
jax: 0.10.0
libtpu: 0.0.40
codegen_flags: <defaults>
</compile_context>

<pallas_src>
import functools

import jax
import jax.numpy as jnp
from jax.experimental import pallas as pl
from jax.experimental.pallas import tpu as pltpu

D_IN, D_H1, D_H2, D_OUT = 21, 20, 38, 1
_LANE = 128


def mlp_kernel(x_ref, w1_ref, b1_ref, w2_ref, b2_ref, w3_ref, b3_ref, o_ref):
    # x_ref: (D_IN, TILE_B) with batch on lanes; weights stored (out, in).
    x = x_ref[...]
    h1 = jnp.dot(w1_ref[...], x, preferred_element_type=jnp.float32)
    h1 = jnp.maximum(h1 + b1_ref[...], 0.0)                      # (D_H1, TILE_B)
    h2 = jnp.dot(w2_ref[...], h1, preferred_element_type=jnp.float32)
    h2 = jnp.maximum(h2 + b2_ref[...], 0.0)                      # (D_H2, TILE_B)
    h3 = jnp.dot(w3_ref[...], h2, preferred_element_type=jnp.float32)
    o_ref[...] = (h3 + b3_ref[0, 0]).astype(o_ref.dtype)         # (1, TILE_B) lane-dense


def _round_up(n, m):
    return ((n + m - 1) // m) * m


@functools.partial(jax.jit, static_argnames=("tile_b",))
def mlp_forward_t(x_t, params, tile_b=32768):
    """x_t: (D_IN, B) float32 (batch already on the lane axis). Returns (D_OUT, B)."""
    w1, b1, w2, b2, w3, b3 = params
    B = x_t.shape[1]
    tile_b = _round_up(int(tile_b), _LANE)

    # Pad batch only to the next lane multiple (<=127 columns); fused with any
    # upstream copy under jit.  Grid blocks need NOT divide B_pad: the ragged
    # last block reads garbage / drops OOB writes, and every column is
    # independent, so slicing [:, :B] at the end keeps the result exact.
    B_pad = _round_up(B, _LANE)
    if B_pad != B:
        x_t = jnp.pad(x_t, ((0, 0), (0, B_pad - B)))

    tile_b_eff = min(tile_b, B_pad)
    # Keep >=2 grid steps when possible so v7x's two TensorCores both get work.
    if B_pad >= 2 * _LANE and pl.cdiv(B_pad, tile_b_eff) == 1:
        tile_b_eff = _round_up(B_pad // 2, _LANE)
    n_tiles = pl.cdiv(B_pad, tile_b_eff)

    const = lambda i: (0, 0)
    out = pl.pallas_call(
        mlp_kernel,
        out_shape=jax.ShapeDtypeStruct((D_OUT, B_pad), jnp.float32),
        grid=(n_tiles,),
        in_specs=[
            pl.BlockSpec((D_IN, tile_b_eff), lambda i: (0, i)),    # x streamed, lane-dense
            pl.BlockSpec(w1.shape, const),                         # weights VMEM-resident
            pl.BlockSpec(b1.shape, const),
            pl.BlockSpec(w2.shape, const),
            pl.BlockSpec(b2.shape, const),
            pl.BlockSpec(w3.shape, const),
            pl.BlockSpec(memory_space=pltpu.MemorySpace.SMEM),     # scalar fc3 bias
        ],
        out_specs=pl.BlockSpec((D_OUT, tile_b_eff), lambda i: (0, i)),
        compiler_params=pltpu.CompilerParams(
            dimension_semantics=("parallel",),
            vmem_limit_bytes=48 * 1024 * 1024,
        ),
    )(x_t, w1, b1, w2, b2, w3, b3)

    return out[:, :B]


@functools.partial(jax.jit, static_argnames=("tile_b",))
def mlp_forward(x, params, tile_b=32768):
    """x: (B, D_IN) float32. Returns (B, D_OUT), matching the PyTorch forward.

    The x.T here is the only extra HBM pass; callers that can produce x in
    (D_IN, B) layout should call mlp_forward_t directly and avoid it.
    """
    return mlp_forward_t(x.T, params, tile_b=tile_b).T


def init_params(key):
    """Mirror nn.Linear init: uniform(-1/sqrt(fan_in), 1/sqrt(fan_in)).

    Weights stored (out_features, in_features) like PyTorch; biases as (out, 1)
    column vectors so they broadcast over the lane (batch) axis in-kernel.
    """
    dims = [(D_IN, D_H1), (D_H1, D_H2), (D_H2, D_OUT)]
    params = []
    keys = jax.random.split(key, 2 * len(dims))
    for idx, (fan_in, fan_out) in enumerate(dims):
        bound = 1.0 / jnp.sqrt(jnp.float32(fan_in))
        w = jax.random.uniform(
            keys[2 * idx], (fan_out, fan_in), jnp.float32, -bound, bound
        )
        b = jax.random.uniform(
            keys[2 * idx + 1], (fan_out, 1), jnp.float32, -bound, bound
        )
        params.extend([w, b])
    return tuple(params)


def reference_forward(x, params):
    w1, b1, w2, b2, w3, b3 = params
    h = jnp.maximum(x @ w1.T + b1.T, 0.0)
    h = jnp.maximum(h @ w2.T + b2.T, 0.0)
    return h @ w3.T + b3.T


if __name__ == "__main__":
    key = jax.random.PRNGKey(0)
    pkey, k1, k2 = jax.random.split(key, 3)
    params = init_params(pkey)

    # Case 1: tiny batch, single (padded-to-128) tile.
    x_small = jax.random.normal(k1, (8, D_IN), jnp.float32)
    out_small = mlp_forward(x_small, params)
    jax.block_until_ready(out_small)
    ref_small = reference_forward(x_small, params)
    assert out_small.shape == (8, D_OUT)
    assert jnp.allclose(out_small, ref_small, atol=1e-5, rtol=1e-5)

    # Case 2: multi-tile grid with a ragged last block
    # (B=300 -> B_pad=384, tile_b=256 -> 2 grid steps, second block overhangs).
    x_big = jax.random.normal(k2, (300, D_IN), jnp.float32)
    out_big = mlp_forward(x_big, params, tile_b=256)
    jax.block_until_ready(out_big)
    ref_big = reference_forward(x_big, params)
    assert out_big.shape == (300, D_OUT)
    assert jnp.allclose(out_big, ref_big, atol=1e-5, rtol=1e-5)

    print("KERNEL_OK")
</pallas_src>

<mosaic_0001>
module attributes {stable_mosaic.version = 11 : i64} {
  func.func @mlp_kernel(%arg0: i32, %arg1: memref<21x128xf32, #tpu.memory_space<vmem>>, %arg2: memref<20x21xf32, #tpu.memory_space<vmem>>, %arg3: memref<20x1xf32, #tpu.memory_space<vmem>>, %arg4: memref<38x20xf32, #tpu.memory_space<vmem>>, %arg5: memref<38x1xf32, #tpu.memory_space<vmem>>, %arg6: memref<1x38xf32, #tpu.memory_space<vmem>>, %arg7: memref<1x1xf32, #tpu.memory_space<smem>>, %arg8: memref<1x128xf32, #tpu.memory_space<vmem>>) attributes {dimension_semantics = [#tpu.dimension_semantics<parallel>], iteration_bounds = array<i64: 1>, scalar_prefetch = 0 : i64, scratch_operands = 0 : i64, tpu.core_type = #tpu.core_type<tc>, window_params = [{transform_indices = @transform_0, window_bounds = array<i64: 21, 128>}, {pipeline_mode = #tpu.pipeline_mode<synchronous>, transform_indices = @transform_1, window_bounds = array<i64: 20, 21>}, {pipeline_mode = #tpu.pipeline_mode<synchronous>, transform_indices = @transform_2, window_bounds = array<i64: 20, 1>}, {pipeline_mode = #tpu.pipeline_mode<synchronous>, transform_indices = @transform_3, window_bounds = array<i64: 38, 20>}, {pipeline_mode = #tpu.pipeline_mode<synchronous>, transform_indices = @transform_4, window_bounds = array<i64: 38, 1>}, {pipeline_mode = #tpu.pipeline_mode<synchronous>, transform_indices = @transform_5, window_bounds = array<i64: 1, 38>}, {transform_indices = @transform_6, window_bounds = array<i64: 1, 1>}, {transform_indices = @transform_7, window_bounds = array<i64: 1, 128>}]} {
    %c0 = arith.constant 0 : index
    %c0_0 = arith.constant 0 : index
    %0 = vector.load %arg1[%c0, %c0_0] : memref<21x128xf32, #tpu.memory_space<vmem>>, vector<21x128xf32>
    %c0_1 = arith.constant 0 : index
    %c0_2 = arith.constant 0 : index
    %1 = vector.load %arg2[%c0_1, %c0_2] : memref<20x21xf32, #tpu.memory_space<vmem>>, vector<20x21xf32>
    %cst = arith.constant dense<0.000000e+00> : vector<20x128xf32>
    %2 = tpu.matmul %1, %0, %cst {dimension_numbers = #tpu.dot_dimension_numbers<[1], [0], [0], [1], [0, 0, 1, 1], [], []>} : vector<20x21xf32>, vector<21x128xf32>, vector<20x128xf32> -> vector<20x128xf32>
    %c0_3 = arith.constant 0 : index
    %c0_4 = arith.constant 0 : index
    %3 = vector.load %arg3[%c0_3, %c0_4] : memref<20x1xf32, #tpu.memory_space<vmem>>, vector<20x1xf32>
    %4 = vector.broadcast %3 : vector<20x1xf32> to vector<20x128xf32>
    %5 = arith.addf %2, %4 : vector<20x128xf32>
    %cst_5 = arith.constant 0.000000e+00 : f32
    %6 = vector.broadcast %cst_5 : f32 to vector<20x128xf32>
    %7 = arith.maximumf %5, %6 : vector<20x128xf32>
    %c0_6 = arith.constant 0 : index
    %c0_7 = arith.constant 0 : index
    %8 = vector.load %arg4[%c0_6, %c0_7] : memref<38x20xf32, #tpu.memory_space<vmem>>, vector<38x20xf32>
    %cst_8 = arith.constant dense<0.000000e+00> : vector<38x128xf32>
    %9 = tpu.matmul %8, %7, %cst_8 {dimension_numbers = #tpu.dot_dimension_numbers<[1], [0], [0], [1], [0, 0, 1, 1], [], []>} : vector<38x20xf32>, vector<20x128xf32>, vector<38x128xf32> -> vector<38x128xf32>
    %c0_9 = arith.constant 0 : index
    %c0_10 = arith.constant 0 : index
    %10 = vector.load %arg5[%c0_9, %c0_10] : memref<38x1xf32, #tpu.memory_space<vmem>>, vector<38x1xf32>
    %11 = vector.broadcast %10 : vector<38x1xf32> to vector<38x128xf32>
    %12 = arith.addf %9, %11 : vector<38x128xf32>
    %cst_11 = arith.constant 0.000000e+00 : f32
    %13 = vector.broadcast %cst_11 : f32 to vector<38x128xf32>
    %14 = arith.maximumf %12, %13 : vector<38x128xf32>
    %c0_12 = arith.constant 0 : index
    %c0_13 = arith.constant 0 : index
    %15 = vector.load %arg6[%c0_12, %c0_13] : memref<1x38xf32, #tpu.memory_space<vmem>>, vector<1x38xf32>
    %cst_14 = arith.constant dense<0.000000e+00> : vector<1x128xf32>
    %16 = tpu.matmul %15, %14, %cst_14 {dimension_numbers = #tpu.dot_dimension_numbers<[1], [0], [0], [1], [0, 0, 1, 1], [], []>} : vector<1x38xf32>, vector<38x128xf32>, vector<1x128xf32> -> vector<1x128xf32>
    %c0_15 = arith.constant 0 : index
    %c0_16 = arith.constant 0 : index
    %17 = memref.load %arg7[%c0_15, %c0_16] : memref<1x1xf32, #tpu.memory_space<smem>>
    %18 = vector.broadcast %17 : f32 to vector<1x128xf32>
    %19 = arith.addf %16, %18 : vector<1x128xf32>
    %c0_17 = arith.constant 0 : index
    %c0_18 = arith.constant 0 : index
    %20 = vector.load %arg8[%c0_17, %c0_18] : memref<1x128xf32, #tpu.memory_space<vmem>>, vector<1x128xf32>
    tpu.vector_store %arg8[%c0_17, %c0_18], %19 {strides = array<i32>} : memref<1x128xf32, #tpu.memory_space<vmem>>, vector<1x128xf32>,
    return
  }
  func.func @transform_0(%arg0: i32) -> (i32, i32) {
    %c0_i32 = arith.constant 0 : i32
    %c0_i32_0 = arith.constant 0 : i32
    return %c0_i32, %arg0 : i32, i32
  }
  func.func @transform_1(%arg0: i32) -> (i32, i32) {
    %c0_i32 = arith.constant 0 : i32
    %c0_i32_0 = arith.constant 0 : i32
    %c0_i32_1 = arith.constant 0 : i32
    return %c0_i32, %c0_i32_0 : i32, i32
  }
  func.func @transform_2(%arg0: i32) -> (i32, i32) {
    %c0_i32 = arith.constant 0 : i32
    %c0_i32_0 = arith.constant 0 : i32
    %c0_i32_1 = arith.constant 0 : i32
    return %c0_i32, %c0_i32_0 : i32, i32
  }
  func.func @transform_3(%arg0: i32) -> (i32, i32) {
    %c0_i32 = arith.constant 0 : i32
    %c0_i32_0 = arith.constant 0 : i32
    %c0_i32_1 = arith.constant 0 : i32
    return %c0_i32, %c0_i32_0 : i32, i32
  }
  func.func @transform_4(%arg0: i32) -> (i32, i32) {
    %c0_i32 = arith.constant 0 : i32
    %c0_i32_0 = arith.constant 0 : i32
    %c0_i32_1 = arith.constant 0 : i32
    return %c0_i32, %c0_i32_0 : i32, i32
  }
  func.func @transform_5(%arg0: i32) -> (i32, i32) {
    %c0_i32 = arith.constant 0 : i32
    %c0_i32_0 = arith.constant 0 : i32
    %c0_i32_1 = arith.constant 0 : i32
    return %c0_i32, %c0_i32_0 : i32, i32
  }
  func.func @transform_6(%arg0: i32) -> (i32, i32) {
    %c0_i32 = arith.constant 0 : i32
    %c0_i32_0 = arith.constant 0 : i32
    %c0_i32_1 = arith.constant 0 : i32
    return %c0_i32, %c0_i32_0 : i32, i32
  }
  func.func @transform_7(%arg0: i32) -> (i32, i32) {
    %c0_i32 = arith.constant 0 : i32
    %c0_i32_0 = arith.constant 0 : i32
    return %c0_i32, %arg0 : i32, i32
  }
}

</mosaic_0001>

<llo_original>
// kernel: mlp_forward_t.1
$region0: #{mlp_forward_t.1}
  #allocation0 [shape = 'u32[]', space=smem, size = 0x4, offset = 0x4, fixed_abs, tag = 'smem constant byte address 0x4 - core index']
  #allocation1 [shape = 'u32[72,128]{1,0:T(1,128)}', space=vmem, size = 0x9000, scoped, tag = 'internal scratch']
  #allocation2 [shape = 'f32[1,1]{1,0:T(1,128)S(6)}', space=smem, size = 0x200, scoped, tag = 'scoped memory for mlp_forward_t.1']
  %s0 = inlined_call_operand.vmem [shape: f32[21,128], index: 0, kind: input, shape index: {}]
  %s1 = inlined_call_operand.vmem [shape: f32[20,21], index: 1, kind: input, shape index: {}]
  %s2 = inlined_call_operand.vmem [shape: f32[20,1], index: 2, kind: input, shape index: {}]
  %s3 = inlined_call_operand.vmem [shape: f32[38,20], index: 3, kind: input, shape index: {}]
  %s4 = inlined_call_operand.vmem [shape: f32[38,1], index: 4, kind: input, shape index: {}]
  %s5 = inlined_call_operand.vmem [shape: f32[1,38], index: 5, kind: input, shape index: {}]
  %s6 = inlined_call_operand.<no memory space> [shape: f32[1,1], index: 6, kind: input, shape index: {}]
  %s7 = inlined_call_operand.hbm [shape: f32[1,128], index: 7, kind: output, shape index: {}]
  %s8 = sld [smem:[#allocation0]]
  $region38: #{mlp_forward_t.1} parent=0
    _
  %s10 = ssub.s32 1, %s8
  %s11 = scalar_select 0, %s10, %s8
  %12 = sst [smem:[#allocation2]] %s6
  $region1: #{mlp_forward_t.1} parent=0
    #allocation3 [shape = 'u8[512]{0}', space=vmem, size = 0x400, scoped, tag = 'output window, operand 0, single buffered']
    #allocation4 [shape = 's32[1]{0}', space=sflag, size = 0x4, scoped, tag = 'scoped memory for mlp_forward_t.1']
    %13 = vsyncpa [#allocation4], 0
    // Predicated region
    $region2: #{mlp_forward_t.1} parent=1 // pred_check
      _
    $region3: #{mlp_forward_t.1} parent=1 // pred_check_branch
      %15 = sbr.rel (0) target = $region5
    $region4: #{mlp_forward_t.1} parent=1 // pred_region
      _
    $region5: #{mlp_forward_t.1} parent=1 // pred_fallthru
      _
    // Predicated region
    $region6: #{mlp_forward_t.1} parent=1 // pred_check
      _
    $region7: #{mlp_forward_t.1} parent=1 // pred_check_branch
      %17 = sbr.rel (0) target = $region9
    $region8: #{mlp_forward_t.1} parent=1 // pred_region
      _
    $region9: #{mlp_forward_t.1} parent=1 // pred_fallthru
      _
    // Predicated region
    $region10: #{mlp_forward_t.1} parent=1 // pred_check
      _
    $region11: #{mlp_forward_t.1} parent=1 // pred_check_branch
      %19 = sbr.rel (0) target = $region13
    $region12: #{mlp_forward_t.1} parent=1 // pred_region
      _
    $region13: #{mlp_forward_t.1} parent=1 // pred_fallthru
      _
    // Predicated region
    $region14: #{mlp_forward_t.1} parent=1 // pred_check
      _
    $region15: #{mlp_forward_t.1} parent=1 // pred_check_branch
      %21 = sbr.rel (0) target = $region17
    $region16: #{mlp_forward_t.1} parent=1 // pred_region
      _
    $region17: #{mlp_forward_t.1} parent=1 // pred_fallthru
      _
    // Predicated region
    $region18: #{mlp_forward_t.1} parent=1 // pred_check
      _
    $region19: #{mlp_forward_t.1} parent=1 // pred_check_branch
      %23 = sbr.rel (0) target = $region21
    $region20: #{mlp_forward_t.1} parent=1 // pred_region
      _
    $region21: #{mlp_forward_t.1} parent=1 // pred_fallthru
      _
    // Predicated region
    $region22: #{mlp_forward_t.1} parent=1 // pred_check
      _
    $region23: #{mlp_forward_t.1} parent=1 // pred_check_branch
      %25 = sbr.rel (0) target = $region25
    $region24: #{mlp_forward_t.1} parent=1 // pred_region
      _
    $region25: #{mlp_forward_t.1} parent=1 // pred_fallthru
      _
    // Predicated region
    $region26: #{mlp_forward_t.1} parent=1 // pred_check
      _
    $region27: #{mlp_forward_t.1} parent=1 // pred_check_branch
      %27 = sbr.rel (0) target = $region29
    $region28: #{mlp_forward_t.1} parent=1 // pred_region
      _
    $region29: #{mlp_forward_t.1} parent=1 // pred_fallthru
      _
    %v28 = vld [vmem:[%s0] sm:$0xff]
    %v29 = vld [vmem:[%s0 + $0x8] sm:$0xff]
    %v30 = vld [vmem:[%s0 + $0x10] sm:$0x1f]
    %v31 = vld [vmem:[%s1] sm:$0xff]
    %v32 = vld [vmem:[%s1 + $0x8] sm:$0xff]
    %v33 = vld [vmem:[%s1 + $0x10] sm:$0xf]
    %v34 = vld [vmem:[%s2] sm:$0xff]
    %v35 = vld [vmem:[%s2 + $0x8] sm:$0xff]
    %v36 = vld [vmem:[%s2 + $0x10] sm:$0xf]
    %38 = vset.pattern.permute.xlu0 0
    %39 = vperm.xlu0 %38, %v34
    %v40 = vpop.permute.xlu0 %39
    %43 = vset.pattern.permute.xlu0 0
    %44 = vperm.xlu0 %43, %v35
    %v45 = vpop.permute.xlu0 %44
    %48 = vset.pattern.permute.xlu0 0
    %49 = vperm.xlu0 %48, %v36
    %v50 = vpop.permute.xlu0 %49
    %vm52 = vcmask 171008
    %v54 = vsel %vm52, %v31, 0
    %v57 = vsel %vm52, %v32, 0
    %v60 = vsel %vm52, %v33, 0
    %vm62 = vcmask 1044480
    %v64 = vsel %vm62, %v30, 0
    %66 = vmatpush.msra.mxu0 0.0
    %67 = vmatpush.msra.mxu0 0.0
    %68 = vmatpush.msra.mxu0 0.0
    %69 = vmatpush.msra.mxu0 0.0
    %70 = vmatpush.msra.mxu0 0.0
    %71 = vmatpush.msra.mxu0 0.0
    %72 = vmatpush.msra.mxu0 0.0
    %73 = vmatpush.msra.mxu0 0.0
    %74 = vmatpush.msra.mxu0 0.0
    %75 = vmatpush.msra.mxu0 0.0
    %76 = vmatpush.msra.mxu0 0.0
    %77 = vmatpush.msra.mxu0 0.0
    %78 = vmatpush.msra.mxu0 0.0
    %79 = vmatpush.msra.mxu0 %v64
    %80 = vmatpush.msra.mxu0 %v29
    %81 = vmatpush.msra.mxu0 %v28
    %82 = vmatmul.f32.gmra.mxu0 %v54
    %v83 = vpop.f32.mrf.mxu0
    %v84 = vadd.f32 %v40, %v83
    %85 = vmatmul.f32.gmra.mxu0 %v57
    %v86 = vpop.f32.mrf.mxu0
    %v87 = vadd.f32 %v45, %v86
    %88 = vmatmul.f32.gmra.mxu0 %v60
    %v89 = vpop.f32.mrf.mxu0
    %v90 = vadd.f32 %v50, %v89
    %91 = vdwg.mxu0
    %v92 = vmax.f32 %v84, 0.0
    %v93 = vmax.f32 %v87, 0.0
    %v94 = vmax.f32 %v90, 0.0
    %v95 = vld [vmem:[%s3] sm:$0xff]
    %v96 = vld [vmem:[%s3 + $0x8] sm:$0xff]
    %v97 = vld [vmem:[%s3 + $0x10] sm:$0xff]
    %v98 = vld [vmem:[%s3 + $0x18] sm:$0xff]
    %v99 = vld [vmem:[%s3 + $0x20] sm:$0x3f]
    %v100 = vld [vmem:[%s4] sm:$0xff]
    %v101 = vld [vmem:[%s4 + $0x8] sm:$0xff]
    %v102 = vld [vmem:[%s4 + $0x10] sm:$0xff]
    %v103 = vld [vmem:[%s4 + $0x18] sm:$0xff]
    %v104 = vld [vmem:[%s4 + $0x20] sm:$0x3f]
    %106 = vset.pattern.permute.xlu0 0
    %107 = vperm.xlu0 %106, %v100
    %v108 = vpop.permute.xlu0 %107
    %111 = vset.pattern.permute.xlu0 0
    %112 = vperm.xlu0 %111, %v101
    %v113 = vpop.permute.xlu0 %112
    %116 = vset.pattern.permute.xlu0 0
    %117 = vperm.xlu0 %116, %v102
    %v118 = vpop.permute.xlu0 %117
    %121 = vset.pattern.permute.xlu0 0
    %122 = vperm.xlu0 %121, %v103
    %v123 = vpop.permute.xlu0 %122
    %126 = vset.pattern.permute.xlu0 0
    %127 = vperm.xlu0 %126, %v104
    %v128 = vpop.permute.xlu0 %127
    %vm130 = vcmask 162816
    %v132 = vsel %vm130, %v95, 0
    %v135 = vsel %vm130, %v96, 0
    %v138 = vsel %vm130, %v97, 0
    %v141 = vsel %vm130, %v98, 0
    %v144 = vsel %vm130, %v99, 0
    %vm146 = vcmask 1043456
    %v148 = vsel %vm146, %v94, 0
    %150 = vmatpush.msra.mxu0 0.0
    %151 = vmatpush.msra.mxu0 0.0
    %152 = vmatpush.msra.mxu0 0.0
    %153 = vmatpush.msra.mxu0 0.0
    %154 = vmatpush.msra.mxu0 0.0
    %155 = vmatpush.msra.mxu0 0.0
    %156 = vmatpush.msra.mxu0 0.0
    %157 = vmatpush.msra.mxu0 0.0
    %158 = vmatpush.msra.mxu0 0.0
    %159 = vmatpush.msra.mxu0 0.0
    %160 = vmatpush.msra.mxu0 0.0
    %161 = vmatpush.msra.mxu0 0.0
    %162 = vmatpush.msra.mxu0 0.0
    %163 = vmatpush.msra.mxu0 %v148
    %164 = vmatpush.msra.mxu0 %v93
    %165 = vmatpush.msra.mxu0 %v92
    %166 = vmatmul.f32.gmra.mxu0 %v132
    %v167 = vpop.f32.mrf.mxu0
    %v168 = vadd.f32 %v108, %v167
    %169 = vmatmul.f32.gmra.mxu0 %v135
    %v170 = vpop.f32.mrf.mxu0
    %v171 = vadd.f32 %v113, %v170
    %172 = vmatmul.f32.gmra.mxu0 %v138
    %v173 = vpop.f32.mrf.mxu0
    %v174 = vadd.f32 %v118, %v173
    %175 = vmatmul.f32.gmra.mxu0 %v141
    %v176 = vpop.f32.mrf.mxu0
    %v177 = vadd.f32 %v123, %v176
    %178 = vmatmul.f32.gmra.mxu0 %v144
    %v179 = vpop.f32.mrf.mxu0
    %v180 = vadd.f32 %v128, %v179
    %181 = vdwg.mxu0
    %v182 = vmax.f32 %v168, 0.0
    %v183 = vmax.f32 %v171, 0.0
    %v184 = vmax.f32 %v174, 0.0
    %v185 = vmax.f32 %v177, 0.0
    %v186 = vmax.f32 %v180, 0.0
    %v187 = vld [vmem:[%s5] sm:$0x1]
    %s188 = sld [smem:[#allocation2]]
    %v189 = vstv %s188
    %vm190 = vcmask 310272
    %v192 = vsel %vm190, %v187, 0
    %vm194 = vcmask 1045504
    %v196 = vsel %vm194, %v186, 0
    %198 = vmatpush.msra.mxu0 0.0
    %199 = vmatpush.msra.mxu0 0.0
    %200 = vmatpush.msra.mxu0 0.0
    %201 = vmatpush.msra.mxu0 0.0
    %202 = vmatpush.msra.mxu0 0.0
    %203 = vmatpush.msra.mxu0 0.0
    %204 = vmatpush.msra.mxu0 0.0
    %205 = vmatpush.msra.mxu0 0.0
    %206 = vmatpush.msra.mxu0 0.0
    %207 = vmatpush.msra.mxu0 0.0
    %208 = vmatpush.msra.mxu0 0.0
    %209 = vmatpush.msra.mxu0 %v196
    %210 = vmatpush.msra.mxu0 %v185
    %211 = vmatpush.msra.mxu0 %v184
    %212 = vmatpush.msra.mxu0 %v183
    %213 = vmatpush.msra.mxu0 %v182
    %214 = vmatmul.f32.gmra.mxu0 %v192
    %v215 = vpop.f32.mrf.mxu0
    %v216 = vadd.f32 %v189, %v215
    %217 = vdwg.mxu0
    %218 = vst [vmem:[#allocation3] sm:$0x1] %v216
    // Predicated region
    $region30: #{mlp_forward_t.1} parent=1 // pred_check
      _
    $region31: #{mlp_forward_t.1} parent=1 // pred_check_branch
      %220 = sbr.rel (0) target = $region33
    $region32: #{mlp_forward_t.1} parent=1 // pred_region
      %222 = vsyncadd [#allocation4], 0
      %s224 = sshll.u32 [#allocation3], 4
      %s225 = int_to_ptr.vmem [resolvable:$true] %s224
      %s226 = sshll.u32 %s7, 4
      %s227 = int_to_ptr.hbm [resolvable:$true] %s226
      %229 = dma.vmem_to_hbm [thread:$0]  %s225, 16, %s227, [#allocation4]
    $region33: #{mlp_forward_t.1} parent=1 // pred_fallthru
      _
    // Predicated region
    $region34: #{mlp_forward_t.1} parent=1 // pred_check
      _
    $region35: #{mlp_forward_t.1} parent=1 // pred_check_branch
      %231 = sbr.rel (0) target = $region37
    $region36: #{mlp_forward_t.1} parent=1 // pred_region
      %233 = dma.done [#allocation4], 16
    $region37: #{mlp_forward_t.1} parent=1 // pred_fallthru
      _
    %234 = vsyncpa [#allocation4], 1

</llo_original>
